<compile_context>
chip_gen: v6e
topology: v6e:2x2x1
jax: 0.10.0
libtpu: 0.0.40
codegen_flags: <defaults>
</compile_context>

<pallas_src>
import functools

import jax
import jax.numpy as jnp
import numpy as np
from jax.experimental import pallas as pl
from jax.experimental.pallas import tpu as pltpu

LEAKY_SLOPE = 0.01    # nn.LeakyReLU() default negative_slope
BN_EPS = 1e-5         # nn.BatchNorm1d default eps
LANE = 128            # TPU lane width
TILE_CO_MAX = 512     # max feature-tile width (multiple of 128)
MAX_TK = 1024         # max C_in (reduction) tile; larger C_in is K-tiled over the grid


def _round_up(x, m):
    return ((x + m - 1) // m) * m


def _pick_tile_co(c_out_p):
    """Largest 128-multiple divisor of c_out_p (<= TILE_CO_MAX); prefer >= 2 tiles
    so the 'parallel' feature axis can be sharded across v7x's two TensorCores."""
    cands = [t for t in range(LANE, min(TILE_CO_MAX, c_out_p) + 1, LANE)
             if c_out_p % t == 0]
    best = max(cands)
    if best == c_out_p and c_out_p > LANE:
        proper = [t for t in cands if t < c_out_p]
        if proper:
            best = max(proper)
    return best


def _pick_tk(c_in):
    """Reduction tile along C_in. Small C_in stays a single full block; large C_in
    is padded to a 128 multiple and tiled so the weight slab stays bounded."""
    if c_in <= MAX_TK:
        return c_in, c_in                       # (tk, c_in_padded)
    c_in_p = _round_up(c_in, LANE)
    cands = [t for t in range(LANE, MAX_TK + 1, LANE) if c_in_p % t == 0]
    return max(cands), c_in_p


@functools.lru_cache(maxsize=1)
def _vmem_budget_bytes():
    try:
        cap = pltpu.get_tpu_info().vmem_capacity_bytes
    except Exception:
        cap = 64 * 1024 * 1024                  # conservative fallback (v7x-sized)
    return int(0.75 * cap)                      # ~96 MiB on v5e/v6e, ~48 MiB on v7x


def dense_block_kernel(x_ref, wt_ref, gb_ref, o_ref, acc_ref):
    """One (feature-tile j, reduction-tile k) grid step of
       y = leaky_relu(batchnorm(x @ Wt)).

    x_ref:   (N, tk)        activation slab (native dtype)
    wt_ref:  (tk, tile_co)  weight slab (native dtype)
    gb_ref:  (2, tile_co)   packed [gamma; beta]
    o_ref:   (N, tile_co)   lane-dense output slab (written on last k step)
    acc_ref: (N, tile_co)   f32 matmul accumulator (VMEM scratch)
    """
    k = pl.program_id(1)

    @pl.when(k == 0)
    def _():
        acc_ref[...] = jnp.zeros_like(acc_ref)

    # Linear (MXU): native-dtype operands, f32 accumulation.
    acc_ref[...] += jnp.dot(x_ref[...], wt_ref[...],
                            preferred_element_type=jnp.float32)

    @pl.when(k == pl.num_programs(1) - 1)
    def _():
        y = acc_ref[...]                                   # (N, tile_co) f32
        inv_n = 1.0 / y.shape[0]

        # BatchNorm1d training-mode stats (per-feature, biased variance) via
        # E[y^2] - E[y]^2 -> only two column reductions, no centered temporary.
        s1 = jnp.sum(y, axis=0, keepdims=True)
        s2 = jnp.sum(y * y, axis=0, keepdims=True)
        mean = s1 * inv_n
        var = s2 * inv_n - mean * mean

        gamma = gb_ref[0:1, :].astype(jnp.float32)
        beta = gb_ref[1:2, :].astype(jnp.float32)
        scale = gamma * jax.lax.rsqrt(var + BN_EPS)        # EUP rsqrt
        shift = beta - mean * scale

        out = y * scale + shift                            # single fused affine pass
        out = jnp.maximum(out, LEAKY_SLOPE * out)          # LeakyReLU (2 VPU ops)
        o_ref[...] = out.astype(o_ref.dtype)


def prepare_params(weight, bias, gamma, beta, tile_co=None):
    """Pre-transpose + lane-pad the parameters ONCE (hoisted out of the call path).

    weight: (C_out, C_in) PyTorch layout; bias/gamma/beta: (C_out,).
    The Linear bias is intentionally DROPPED: under training-mode BatchNorm it
    cancels exactly in (y - mean) and does not affect the variance, so it has no
    effect on the forward output.
    Padded feature columns get zero weight, gamma=1, beta=0 -> BN there yields
    exactly 0 and they are sliced off (only when padding exists).
    """
    del bias  # mathematically a no-op under batch-stat BN
    c_out, c_in = weight.shape
    c_out_p = _round_up(c_out, LANE)
    if tile_co is None:
        tile_co = _pick_tile_co(c_out_p)
    assert c_out_p % tile_co == 0
    pad_co = c_out_p - c_out

    _, c_in_p = _pick_tk(c_in)
    pad_ci = c_in_p - c_in

    wt = jnp.pad(weight, ((0, pad_co), (0, pad_ci))).T            # (C_in_p, C_out_p)
    gamma_p = jnp.pad(gamma, (0, pad_co), constant_values=1.0)
    beta_p = jnp.pad(beta, (0, pad_co))
    gb = jnp.stack([gamma_p, beta_p], axis=0)                     # (2, C_out_p)
    return (wt, gb), tile_co, c_out


@functools.partial(jax.jit, static_argnames=("tile_co", "c_out"))
def _dense_block_call(x, wt, gb, *, tile_co, c_out):
    n, c_in = x.shape
    c_in_p, c_out_p = wt.shape
    if c_in_p > c_in:
        x = jnp.pad(x, ((0, 0), (0, c_in_p - c_in)))
    tk, _ = _pick_tk(c_in)
    n_co = c_out_p // tile_co
    n_k = c_in_p // tk
    grid = (n_co, n_k)

    # Scoped-VMEM budget from the per-step working set (double-buffered slabs,
    # f32 accumulator + temporaries), capped at ~75% of this chip's physical VMEM.
    est = (2 * n * tk * x.dtype.itemsize                  # x slabs (2 bufs)
           + 2 * tk * tile_co * wt.dtype.itemsize         # weight slabs (2 bufs)
           + 2 * 8 * tile_co * gb.dtype.itemsize          # gamma/beta (sublane-padded)
           + 2 * n * tile_co * x.dtype.itemsize           # output slabs (2 bufs)
           + n * tile_co * 4                              # accumulator scratch
           + 4 * n * tile_co * 4)                         # f32 temporaries
    budget = _vmem_budget_bytes()
    vmem_limit = int(min(budget, max(32 * 1024 * 1024, 2 * est)))

    out = pl.pallas_call(
        dense_block_kernel,
        out_shape=jax.ShapeDtypeStruct((n, c_out_p), x.dtype),
        grid=grid,
        in_specs=[
            pl.BlockSpec((n, tk), lambda j, k: (0, k)),           # activations
            pl.BlockSpec((tk, tile_co), lambda j, k: (k, j)),     # weight slab
            pl.BlockSpec((2, tile_co), lambda j, k: (0, j)),      # packed gamma/beta
        ],
        out_specs=pl.BlockSpec((n, tile_co), lambda j, k: (0, j)),
        scratch_shapes=[pltpu.VMEM((n, tile_co), jnp.float32)],
        compiler_params=pltpu.CompilerParams(
            dimension_semantics=("parallel", "arbitrary"),  # feature tiles -> 2 TCs (v7x)
            vmem_limit_bytes=vmem_limit,
        ),
    )(x, wt, gb)

    if c_out_p == c_out:
        return out                     # avoid the extra HBM->HBM slice copy
    return out[:, :c_out]


def dense_block(x, weight, bias, gamma, beta):
    """Convenience wrapper: x (N, C_in), weight (C_out, C_in) [PyTorch layout],
    bias/gamma/beta (C_out,). For repeated calls with the same weights, call
    prepare_params() once and reuse _dense_block_call directly."""
    params, tile_co, c_out = prepare_params(weight, bias, gamma, beta)
    return _dense_block_call(x, *params, tile_co=tile_co, c_out=c_out)


def dense_block_ref(x, weight, bias, gamma, beta):
    """Pure-JAX reference matching PyTorch DenseBlock forward (training-mode BN)."""
    y = jnp.dot(x, weight.T, precision=jax.lax.Precision.HIGHEST) + bias
    mean = jnp.mean(y, axis=0, keepdims=True)
    var = jnp.mean((y - mean) ** 2, axis=0, keepdims=True)
    y = (y - mean) / jnp.sqrt(var + BN_EPS)
    y = y * gamma + beta
    return jnp.where(y > 0, y, LEAKY_SLOPE * y)


def _make_params(key, c_in, c_out):
    k_w, k_b, k_g, k_be = jax.random.split(key, 4)
    bound = 1.0 / np.sqrt(c_in)
    weight = jax.random.uniform(k_w, (c_out, c_in), jnp.float32, -bound, bound)
    bias = jax.random.uniform(k_b, (c_out,), jnp.float32, -bound, bound)
    gamma = jnp.ones((c_out,), jnp.float32) + 0.1 * jax.random.normal(k_g, (c_out,))
    beta = 0.1 * jax.random.normal(k_be, (c_out,))
    return weight, bias, gamma, beta


if __name__ == "__main__":
    key = jax.random.PRNGKey(0)
    k1, k2, k3, k4, k5, k6 = jax.random.split(key, 6)

    # --- small test matching the module's toy configuration -------------------
    N, C_IN, C_OUT = 8, 32, 16
    x = jax.random.normal(k1, (N, C_IN), dtype=jnp.float32)
    weight, bias, gamma, beta = _make_params(k2, C_IN, C_OUT)
    out = jax.block_until_ready(dense_block(x, weight, bias, gamma, beta))
    ref = dense_block_ref(x, weight, bias, gamma, beta)
    np.testing.assert_allclose(np.asarray(out), np.asarray(ref), rtol=2e-5, atol=2e-5)

    # --- multi-feature-tile path: 640 now pads to 640 (5 tiles of 128) --------
    N2, C_IN2, C_OUT2 = 32, 128, 640
    x2 = jax.random.normal(k3, (N2, C_IN2), dtype=jnp.float32)
    weight2, bias2, gamma2, beta2 = _make_params(k4, C_IN2, C_OUT2)
    out2 = jax.block_until_ready(dense_block(x2, weight2, bias2, gamma2, beta2))
    ref2 = dense_block_ref(x2, weight2, bias2, gamma2, beta2)
    np.testing.assert_allclose(np.asarray(out2), np.asarray(ref2), rtol=1e-4, atol=1e-4)

    # --- K-tiled path (C_in > MAX_TK): accumulator over the reduction grid ----
    N3, C_IN3, C_OUT3 = 16, 1280, 256
    x3 = jax.random.normal(k5, (N3, C_IN3), dtype=jnp.float32)
    weight3, bias3, gamma3, beta3 = _make_params(k6, C_IN3, C_OUT3)
    out3 = jax.block_until_ready(dense_block(x3, weight3, bias3, gamma3, beta3))
    ref3 = dense_block_ref(x3, weight3, bias3, gamma3, beta3)
    np.testing.assert_allclose(np.asarray(out3), np.asarray(ref3), rtol=1e-4, atol=1e-4)

    print("KERNEL_OK")
</pallas_src>

<mosaic_0001>
module attributes {stable_mosaic.version = 11 : i64} {
  func.func @dense_block_kernel(%arg0: i32, %arg1: i32, %arg2: memref<8x32xf32, #tpu.memory_space<vmem>>, %arg3: memref<32x128xf32, #tpu.memory_space<vmem>>, %arg4: memref<2x128xf32, #tpu.memory_space<vmem>>, %arg5: memref<8x128xf32, #tpu.memory_space<vmem>>, %arg6: memref<8x128xf32, #tpu.memory_space<vmem>>) attributes {dimension_semantics = [#tpu.dimension_semantics<parallel>, #tpu.dimension_semantics<arbitrary>], iteration_bounds = array<i64: 1, 1>, scalar_prefetch = 0 : i64, scratch_operands = 1 : i64, tpu.core_type = #tpu.core_type<tc>, window_params = [{transform_indices = @transform_0, window_bounds = array<i64: 8, 32>}, {transform_indices = @transform_1, window_bounds = array<i64: 32, 128>}, {transform_indices = @transform_2, window_bounds = array<i64: 2, 128>}, {transform_indices = @transform_3, window_bounds = array<i64: 8, 128>}]} {
    %c0_i32 = arith.constant 0 : i32
    %0 = arith.cmpi eq, %arg1, %c0_i32 : i32
    %1 = arith.extui %0 : i1 to i32
    %c0_i32_0 = arith.constant 0 : i32
    %2 = arith.cmpi ne, %1, %c0_i32_0 : i32
    scf.if %2 {
      %cst_10 = arith.constant 0.000000e+00 : f32
      %12 = vector.broadcast %cst_10 : f32 to vector<8x128xf32>
      %c0_11 = arith.constant 0 : index
      %c0_12 = arith.constant 0 : index
      %13 = vector.load %arg6[%c0_11, %c0_12] : memref<8x128xf32, #tpu.memory_space<vmem>>, vector<8x128xf32>
      tpu.vector_store %arg6[%c0_11, %c0_12], %12 {strides = array<i32>} : memref<8x128xf32, #tpu.memory_space<vmem>>, vector<8x128xf32>,
    } else {
    }
    %c0 = arith.constant 0 : index
    %c0_1 = arith.constant 0 : index
    %3 = vector.load %arg6[%c0, %c0_1] : memref<8x128xf32, #tpu.memory_space<vmem>>, vector<8x128xf32>
    %c0_2 = arith.constant 0 : index
    %c0_3 = arith.constant 0 : index
    %4 = vector.load %arg2[%c0_2, %c0_3] : memref<8x32xf32, #tpu.memory_space<vmem>>, vector<8x32xf32>
    %c0_4 = arith.constant 0 : index
    %c0_5 = arith.constant 0 : index
    %5 = vector.load %arg3[%c0_4, %c0_5] : memref<32x128xf32, #tpu.memory_space<vmem>>, vector<32x128xf32>
    %cst = arith.constant dense<0.000000e+00> : vector<8x128xf32>
    %6 = tpu.matmul %4, %5, %cst {dimension_numbers = #tpu.dot_dimension_numbers<[1], [0], [0], [1], [0, 0, 1, 1], [], []>} : vector<8x32xf32>, vector<32x128xf32>, vector<8x128xf32> -> vector<8x128xf32>
    %7 = arith.addf %3, %6 : vector<8x128xf32>
    %c0_6 = arith.constant 0 : index
    %c0_7 = arith.constant 0 : index
    %8 = vector.load %arg6[%c0_6, %c0_7] : memref<8x128xf32, #tpu.memory_space<vmem>>, vector<8x128xf32>
    tpu.vector_store %arg6[%c0_6, %c0_7], %7 {strides = array<i32>} : memref<8x128xf32, #tpu.memory_space<vmem>>, vector<8x128xf32>,
    %c0_i32_8 = arith.constant 0 : i32
    %9 = arith.cmpi eq, %arg1, %c0_i32_8 : i32
    %10 = arith.extui %9 : i1 to i32
    %c0_i32_9 = arith.constant 0 : i32
    %11 = arith.cmpi ne, %10, %c0_i32_9 : i32
    scf.if %11 {
      %c0_10 = arith.constant 0 : index
      %c0_11 = arith.constant 0 : index
      %12 = vector.load %arg6[%c0_10, %c0_11] : memref<8x128xf32, #tpu.memory_space<vmem>>, vector<8x128xf32>
      %cst_12 = arith.constant dense<0.000000e+00> : vector<128xf32>
      %13 = vector.multi_reduction <add>, %12, %cst_12 [0] : vector<8x128xf32> to vector<128xf32>
      %14 = vector.shape_cast %13 : vector<128xf32> to vector<1x128xf32>
      %15 = arith.mulf %12, %12 : vector<8x128xf32>
      %cst_13 = arith.constant dense<0.000000e+00> : vector<128xf32>
      %16 = vector.multi_reduction <add>, %15, %cst_13 [0] : vector<8x128xf32> to vector<128xf32>
      %17 = vector.shape_cast %16 : vector<128xf32> to vector<1x128xf32>
      %cst_14 = arith.constant 1.250000e-01 : f32
      %18 = vector.broadcast %cst_14 : f32 to vector<1x128xf32>
      %19 = arith.mulf %14, %18 : vector<1x128xf32>
      %cst_15 = arith.constant 1.250000e-01 : f32
      %20 = vector.broadcast %cst_15 : f32 to vector<1x128xf32>
      %21 = arith.mulf %17, %20 : vector<1x128xf32>
      %22 = arith.mulf %19, %19 : vector<1x128xf32>
      %23 = arith.subf %21, %22 : vector<1x128xf32>
      %c0_16 = arith.constant 0 : index
      %c0_17 = arith.constant 0 : index
      %24 = vector.load %arg4[%c0_16, %c0_17] : memref<2x128xf32, #tpu.memory_space<vmem>>, vector<1x128xf32>
      %c1 = arith.constant 1 : index
      %c0_18 = arith.constant 0 : index
      %25 = vector.load %arg4[%c1, %c0_18] : memref<2x128xf32, #tpu.memory_space<vmem>>, vector<1x128xf32>
      %cst_19 = arith.constant 9.99999974E-6 : f32
      %26 = vector.broadcast %cst_19 : f32 to vector<1x128xf32>
      %27 = arith.addf %23, %26 : vector<1x128xf32>
      %28 = math.rsqrt %27 : vector<1x128xf32>
      %29 = arith.mulf %24, %28 : vector<1x128xf32>
      %30 = arith.mulf %19, %29 : vector<1x128xf32>
      %31 = arith.subf %25, %30 : vector<1x128xf32>
      %32 = vector.broadcast %29 : vector<1x128xf32> to vector<8x128xf32>
      %33 = arith.mulf %12, %32 : vector<8x128xf32>
      %34 = vector.broadcast %31 : vector<1x128xf32> to vector<8x128xf32>
      %35 = arith.addf %33, %34 : vector<8x128xf32>
      %cst_20 = arith.constant 0.00999999977 : f32
      %36 = vector.broadcast %cst_20 : f32 to vector<8x128xf32>
      %37 = arith.mulf %36, %35 : vector<8x128xf32>
      %38 = arith.maximumf %35, %37 : vector<8x128xf32>
      %c0_21 = arith.constant 0 : index
      %c0_22 = arith.constant 0 : index
      %39 = vector.load %arg5[%c0_21, %c0_22] : memref<8x128xf32, #tpu.memory_space<vmem>>, vector<8x128xf32>
      tpu.vector_store %arg5[%c0_21, %c0_22], %38 {strides = array<i32>} : memref<8x128xf32, #tpu.memory_space<vmem>>, vector<8x128xf32>,
    } else {
    }
    return
  }
  func.func @transform_0(%arg0: i32, %arg1: i32) -> (i32, i32) {
    %c0_i32 = arith.constant 0 : i32
    %c0_i32_0 = arith.constant 0 : i32
    return %c0_i32, %arg1 : i32, i32
  }
  func.func @transform_1(%arg0: i32, %arg1: i32) -> (i32, i32) {
    %c0_i32 = arith.constant 0 : i32
    return %arg1, %arg0 : i32, i32
  }
  func.func @transform_2(%arg0: i32, %arg1: i32) -> (i32, i32) {
    %c0_i32 = arith.constant 0 : i32
    %c0_i32_0 = arith.constant 0 : i32
    return %c0_i32, %arg0 : i32, i32
  }
  func.func @transform_3(%arg0: i32, %arg1: i32) -> (i32, i32) {
    %c0_i32 = arith.constant 0 : i32
    %c0_i32_0 = arith.constant 0 : i32
    return %c0_i32, %arg0 : i32, i32
  }
}

</mosaic_0001>

<llo_original>
// kernel: _dense_block_call.1
$region0: #{_dense_block_call.1}
  #allocation0 [shape = 'u32[]', space=smem, size = 0x4, offset = 0x4, fixed_abs, tag = 'smem constant byte address 0x4 - core index']
  #allocation1 [shape = 'u32[144,128]{1,0:T(1,128)}', space=vmem, size = 0x12000, scoped, tag = 'internal scratch']
  #allocation2 [shape = 'f32[8,128]{1,0:T(8,128)}', space=vmem, size = 0x1000, scoped, tag = 'scratch operand']
  %s0 = inlined_call_operand.hbm [shape: f32[8,32], index: 0, kind: input, shape index: {}]
  %s1 = inlined_call_operand.hbm [shape: f32[32,128], index: 1, kind: input, shape index: {}]
  %s2 = inlined_call_operand.vmem [shape: f32[2,128], index: 2, kind: input, shape index: {}]
  %s3 = inlined_call_operand.hbm [shape: f32[8,128], index: 3, kind: output, shape index: {}]
  %s4 = sld [smem:[#allocation0]]
  $region38: #{_dense_block_call.1} parent=0
    _
  %s6 = ssub.s32 1, %s4
  %s7 = scalar_select 0, %s6, %s4
  $region1: #{_dense_block_call.1} parent=0
    #allocation3 [shape = 'u8[4096]{0}', space=vmem, size = 0x1000, scoped, tag = 'input window, operand 0, single buffered']
    #allocation4 [shape = 's32[1]{0}', space=sflag, size = 0x4, scoped, tag = 'scoped memory for _dense_block_call.1']
    #allocation5 [shape = 's32[1]{0}', space=sflag, size = 0x4, scoped, tag = 'scoped memory for _dense_block_call.1']
    #allocation6 [shape = 'u8[16384]{0}', space=vmem, size = 0x4000, scoped, tag = 'input window, operand 1, single buffered']
    #allocation7 [shape = 's32[1]{0}', space=sflag, size = 0x4, scoped, tag = 'scoped memory for _dense_block_call.1']
    #allocation8 [shape = 'u8[4096]{0}', space=vmem, size = 0x1000, scoped, tag = 'output window, operand 0, single buffered']
    %8 = vsyncpa [#allocation4], 0
    %9 = vsyncpa [#allocation7], 0
    %10 = vsyncpa [#allocation5], 0
    // Predicated region
    $region2: #{_dense_block_call.1} parent=1 // pred_check
      _
    $region3: #{_dense_block_call.1} parent=1 // pred_check_branch
      %12 = sbr.rel (0) target = $region5
    $region4: #{_dense_block_call.1} parent=1 // pred_region
      %s14 = ssub.s32 128, 128
      %15 = vsyncadd [#allocation4], %s14
      %s17 = sshll.u32 [#allocation3], 4
      %s18 = int_to_ptr.vmem [resolvable:$true] %s17
      %20 = dma.hbm_to_vmem [thread:$0]  %s0, 128, %s18, [#allocation4]
    $region5: #{_dense_block_call.1} parent=1 // pred_fallthru
      _
    // Predicated region
    $region6: #{_dense_block_call.1} parent=1 // pred_check
      _
    $region7: #{_dense_block_call.1} parent=1 // pred_check_branch
      %22 = sbr.rel (0) target = $region9
    $region8: #{_dense_block_call.1} parent=1 // pred_region
      %s24 = ssub.s32 512, 512
      %25 = vsyncadd [#allocation7], %s24
      %s26 = sshll.u32 [#allocation6], 4
      %s27 = int_to_ptr.vmem [resolvable:$true] %s26
      %32 = dma.hbm_to_vmem [thread:$0]  %s1, 512, %s27, [#allocation7], 128, 128, 8
    $region9: #{_dense_block_call.1} parent=1 // pred_fallthru
      _
    // Predicated region
    $region10: #{_dense_block_call.1} parent=1 // pred_check
      _
    $region11: #{_dense_block_call.1} parent=1 // pred_check_branch
      %34 = sbr.rel (0) target = $region13
    $region12: #{_dense_block_call.1} parent=1 // pred_region
      _
    $region13: #{_dense_block_call.1} parent=1 // pred_fallthru
      _
    // Predicated region
    $region14: #{_dense_block_call.1} parent=1 // pred_check
      _
    $region15: #{_dense_block_call.1} parent=1 // pred_check_branch
      %36 = sbr.rel (0) target = $region17
    $region16: #{_dense_block_call.1} parent=1 // pred_region
      %37 = dma.done [#allocation4], 128
    $region17: #{_dense_block_call.1} parent=1 // pred_fallthru
      _
    // Predicated region
    $region18: #{_dense_block_call.1} parent=1 // pred_check
      _
    $region19: #{_dense_block_call.1} parent=1 // pred_check_branch
      %39 = sbr.rel (0) target = $region21
    $region20: #{_dense_block_call.1} parent=1 // pred_region
      %40 = dma.done [#allocation7], 512
    $region21: #{_dense_block_call.1} parent=1 // pred_fallthru
      _
    %p41 = scmp.eq.s32.totalorder 0, 0
    // Predicated region
    $region22: #{_dense_block_call.1} parent=1 // pred_check
      %p42 = pneg %p41
    $region23: #{_dense_block_call.1} parent=1 // pred_check_branch
      %44 = sbr.rel (%p42) target = $region25
    $region24: #{_dense_block_call.1} parent=1 // pred_region
      %45 = vst [vmem:[#allocation2] sm:$0xff] 0.0
    $region25: #{_dense_block_call.1} parent=1 // pred_fallthru
      _
    %v46 = vld [vmem:[#allocation2] sm:$0xff]
    %v47 = vld [vmem:[#allocation3] sm:$0xff]
    %v48 = vld [vmem:[#allocation6] sm:$0xff]
    %v49 = vld [vmem:[#allocation6 + $0x8] sm:$0xff]
    %v50 = vld [vmem:[#allocation6 + $0x10] sm:$0xff]
    %v51 = vld [vmem:[#allocation6 + $0x18] sm:$0xff]
    %vm52 = vcmask 261120
    %v54 = vsel %vm52, %v47, 0
    %56 = vmatprep.subr.mxu0 0.0
    %57 = vmatpush1.msra.mxu0 0.0
    %58 = vmatprep.subr.mxu0 0.0
    %59 = vmatpush1.msra.mxu0 0.0
    %60 = vmatprep.subr.mxu0 0.0
    %61 = vmatpush1.msra.mxu0 0.0
    %62 = vmatprep.subr.mxu0 0.0
    %63 = vmatpush1.msra.mxu0 0.0
    %64 = vmatprep.subr.mxu0 0.0
    %65 = vmatpush1.msra.mxu0 0.0
    %66 = vmatprep.subr.mxu0 0.0
    %67 = vmatpush1.msra.mxu0 0.0
    %68 = vmatprep.subr.mxu0 0.0
    %69 = vmatpush1.msra.mxu0 0.0
    %70 = vmatprep.subr.mxu0 0.0
    %71 = vmatpush1.msra.mxu0 0.0
    %72 = vmatprep.subr.mxu0 0.0
    %73 = vmatpush1.msra.mxu0 0.0
    %74 = vmatprep.subr.mxu0 0.0
    %75 = vmatpush1.msra.mxu0 0.0
    %76 = vmatprep.subr.mxu0 0.0
    %77 = vmatpush1.msra.mxu0 0.0
    %78 = vmatprep.subr.mxu0 0.0
    %79 = vmatpush1.msra.mxu0 0.0
    %80 = vmatprep.subr.mxu0 0.0
    %81 = vmatpush1.msra.mxu0 %v51
    %82 = vmatprep.subr.mxu0 0.0
    %83 = vmatpush1.msra.mxu0 %v50
    %84 = vmatprep.subr.mxu0 0.0
    %85 = vmatpush1.msra.mxu0 %v49
    %86 = vmatprep.subr.mxu0 0.0
    %87 = vmatpush1.msra.mxu0 %v48
    %88 = vmatprep.subr.mxu0 0.0
    %89 = vmatpush2.msra.mxu0 0.0
    %90 = vmatprep.subr.mxu0 0.0
    %91 = vmatpush2.msra.mxu0 0.0
    %92 = vmatprep.subr.mxu0 0.0
    %93 = vmatpush2.msra.mxu0 0.0
    %94 = vmatprep.subr.mxu0 0.0
    %95 = vmatpush2.msra.mxu0 0.0
    %96 = vmatprep.subr.mxu0 0.0
    %97 = vmatpush2.msra.mxu0 0.0
    %98 = vmatprep.subr.mxu0 0.0
    %99 = vmatpush2.msra.mxu0 0.0
    %100 = vmatprep.subr.mxu0 0.0
    %101 = vmatpush2.msra.mxu0 0.0
    %102 = vmatprep.subr.mxu0 0.0
    %103 = vmatpush2.msra.mxu0 0.0
    %104 = vmatprep.subr.mxu0 0.0
    %105 = vmatpush2.msra.mxu0 0.0
    %106 = vmatprep.subr.mxu0 0.0
    %107 = vmatpush2.msra.mxu0 0.0
    %108 = vmatprep.subr.mxu0 0.0
    %109 = vmatpush2.msra.mxu0 0.0
    %110 = vmatprep.subr.mxu0 0.0
    %111 = vmatpush2.msra.mxu0 0.0
    %112 = vmatprep.subr.mxu0 0.0
    %113 = vmatpush2.msra.mxu0 0.0
    %114 = vmatprep.subr.mxu0 0.0
    %115 = vmatpush2.msra.mxu0 0.0
    %116 = vmatprep.subr.mxu0 0.0
    %117 = vmatpush2.msra.mxu0 0.0
    %118 = vmatprep.subr.mxu0 0.0
    %119 = vmatpush2.msra.mxu0 0.0
    %120 = vmatprep.mubr.f32.mxu0 0.0
    %121 = vmatmul.mubr.f32.gmra.mxu0 %v54
    %v122 = vpop.f32.mrf.mxu0
    %v123 = vadd.f32 0.0, %v122
    %v124 = vpop.f32.mrf.mxu0
    %125 = vdwg.mxu0
    %v126 = vadd.f32 %v46, %v123
    %127 = vst [vmem:[#allocation2] sm:$0xff] %v126
    // Predicated region
    $region26: #{_dense_block_call.1} parent=1 // pred_check
      %p128 = pneg %p41
    $region27: #{_dense_block_call.1} parent=1 // pred_check_branch
      %130 = sbr.rel (%p128) target = $region29
    $region28: #{_dense_block_call.1} parent=1 // pred_region
      %v131 = vld [vmem:[#allocation2] sm:$0xff]
      %v132 = vrot.slane %v131, 4
      %v133 = vadd.f32 %v131, %v132
      %v134 = vrot.slane %v133, 2
      %v135 = vadd.f32 %v133, %v134
      %v136 = vrot.slane %v135, 1
      %v137 = vadd.f32 %v135, %v136
      %v138 = vmul.f32 %v131, %v131
      %v139 = vrot.slane %v138, 4
      %v140 = vadd.f32 %v138, %v139
      %v141 = vrot.slane %v140, 2
      %v142 = vadd.f32 %v140, %v141
      %v143 = vrot.slane %v142, 1
      %v144 = vadd.f32 %v142, %v143
      %v145 = vmul.f32 %v137, 0.125
      %v146 = vmul.f32 %v144, 0.125
      %v147 = vmul.f32 %v145, %v145
      %v148 = vsub.f32 %v146, %v147
      %v149 = vld [vmem:[%s2] sm:$0x1]
      %v150 = vld [vmem:[%s2 + $0x1] sm:$0x1]
      %v151 = vadd.f32 %v148, 1e-05
      %v152 = vrsqrt.pop %v151
      %v153 = vmul.f32 %v149, %v152
      %v154 = vmul.f32 %v145, %v153
      %v155 = vsub.f32 %v150, %v154
      %v156 = vlaneseq
      %v157 = vshrl.u32 %v156, 7
      %v158 = vsub.s32 0, %v157
      %v159 = vrot.slane %v153, %v158
      %v160 = vmul.f32 %v131, %v159
      %v161 = vlaneseq
      %v162 = vshrl.u32 %v161, 7
      %v163 = vsub.s32 0, %v162
      %v164 = vrot.slane %v155, %v163
      %v165 = vadd.f32 %v160, %v164
      %v166 = vmul.f32 %v165, 0.01
      %v167 = vmax.f32 %v165, %v166
      %168 = vst [vmem:[#allocation8] sm:$0xff] %v167
    $region29: #{_dense_block_call.1} parent=1 // pred_fallthru
      _
    // Predicated region
    $region30: #{_dense_block_call.1} parent=1 // pred_check
      _
    $region31: #{_dense_block_call.1} parent=1 // pred_check_branch
      %170 = sbr.rel (0) target = $region33
    $region32: #{_dense_block_call.1} parent=1 // pred_region
      %s172 = ssub.s32 128, 128
      %173 = vsyncadd [#allocation5], %s172
      %s175 = sshll.u32 [#allocation8], 4
      %s176 = int_to_ptr.vmem [resolvable:$true] %s175
      %178 = dma.vmem_to_hbm [thread:$0]  %s176, 128, %s3, [#allocation5]
    $region33: #{_dense_block_call.1} parent=1 // pred_fallthru
      _
    // Predicated region
    $region34: #{_dense_block_call.1} parent=1 // pred_check
      _
    $region35: #{_dense_block_call.1} parent=1 // pred_check_branch
      %180 = sbr.rel (0) target = $region37
    $region36: #{_dense_block_call.1} parent=1 // pred_region
      %181 = dma.done [#allocation5], 128
    $region37: #{_dense_block_call.1} parent=1 // pred_fallthru
      _
    %182 = vsyncpa [#allocation4], 1
    %183 = vsyncpa [#allocation7], 1
    %184 = vsyncpa [#allocation5], 1

</llo_original>
